<compile_context>
chip_gen: v5e
topology: v5e:2x2
jax: 0.10.0
libtpu: 0.0.40
codegen_flags: <defaults>
</compile_context>

<pallas_src>
import functools

import jax
import jax.numpy as jnp
from jax.experimental import pallas as pl
from jax.experimental.pallas import tpu as pltpu


_LANE = 128
_ROW_ALIGN = 64                       # row tiles multiples of 64 (f32/bf16 safe, 8*8)
_VMEM_LIMIT = 32 * 1024 * 1024        # well under v7x 64 MiB physical; raises v5e default


# ----------------------------------------------------------------------------
# small helpers
# ----------------------------------------------------------------------------
def _round_up(x, m):
    return ((x + m - 1) // m) * m


def _detect_num_tensorcores():
    """Best-effort: multi-TC-per-device parts (v7x / v4 / v5p) want >=2 grid blocks."""
    try:
        kind = (getattr(jax.devices()[0], "device_kind", "") or "").lower()
        if any(t in kind for t in ("v7", "v4", "v5p")):
            return 2
    except Exception:
        pass
    return 1


_NUM_TC = _detect_num_tensorcores()


def _choose_tile(n):
    """Row tile: big tiles amortize the ~0.35us per-grid-step cost; keep >=2 blocks
    when the device has 2 TensorCores so the 'parallel' axis feeds both."""
    n_a = _round_up(n, _ROW_ALIGN)
    max_tile = 1024 if _NUM_TC >= 2 else 2048
    if n_a <= max_tile:
        if _NUM_TC >= 2 and n_a >= 2 * _ROW_ALIGN:
            return _round_up(n_a // 2, _ROW_ALIGN)
        return n_a
    return max_tile


def _pad_rows(x2d, n_pad):
    n = x2d.shape[0]
    if n == n_pad:
        return x2d
    return jnp.concatenate(
        [x2d, jnp.zeros((n_pad - n, x2d.shape[1]), x2d.dtype)], axis=0)


def _lanepad(x, k):
    """Zero-extend the lane (channel) dim to k -- in registers only, no HBM cost."""
    c = x.shape[-1]
    if c == k:
        return x
    return jnp.concatenate([x, jnp.zeros((x.shape[0], k - c), x.dtype)], axis=-1)


# ----------------------------------------------------------------------------
# Pallas kernels (per-pixel MLP blocks + merge/blend)
# ----------------------------------------------------------------------------
def _mlp_core(x_bf16, w1_ref, b1_ref, w2_ref, b2_ref):
    """(tn,128)x(128,128) bf16 dot -> relu -> (tn,128)x(128,cout) bf16 dot, f32 acc."""
    x = _lanepad(x_bf16, w1_ref.shape[0])
    h = jnp.dot(x, w1_ref[...], preferred_element_type=jnp.float32) + b1_ref[...]
    h = jnp.maximum(h, 0.0)
    return jnp.dot(h.astype(jnp.bfloat16), w2_ref[...],
                   preferred_element_type=jnp.float32) + b2_ref[...]


def _ifblock_kernel(imgs_ref, gms_ref, flow_ref, w1_ref, b1_ref, w2_ref, b2_ref, o_ref):
    x = jnp.concatenate([imgs_ref[...], gms_ref[...], flow_ref[...]], axis=-1)
    y = _mlp_core(x, w1_ref, b1_ref, w2_ref, b2_ref)
    o_ref[...] = y.astype(o_ref.dtype)


@functools.lru_cache(maxsize=None)
def _make_context_kernel(M):
    """Both contextnet calls share weights -> one kernel computing ctx0|ctx1."""
    def kernel(i0_ref, i1_ref, mf_ref, ms_ref, w1_ref, b1_ref, w2_ref, b2_ref, o_ref):
        mf = mf_ref[...].astype(jnp.bfloat16)
        ms = ms_ref[...]
        y0 = _mlp_core(jnp.concatenate([i0_ref[...], mf[:, :2 * M], ms[:, :M]], axis=-1),
                       w1_ref, b1_ref, w2_ref, b2_ref)
        y1 = _mlp_core(jnp.concatenate([i1_ref[...], mf[:, 2 * M:4 * M], ms[:, M:2 * M]],
                                       axis=-1),
                       w1_ref, b1_ref, w2_ref, b2_ref)
        o_ref[...] = jnp.concatenate([y0, y1], axis=-1).astype(o_ref.dtype)
    return kernel


def _unet_kernel(imgs_ref, gms_ref, pk_ref, ctx_ref, w1_ref, b1_ref, w2_ref, b2_ref, o_ref):
    """Unet residual MLP fused with refined = clamp(crude + residual, 0, 1).
    pk_ref is the merge kernel's packed [tn,16] output:
      [flow(4) | i0w(3) | i1w(3) | mask(1) | crude(3) | pad(2)]."""
    pk = pk_ref[...]
    pk_b = pk.astype(jnp.bfloat16)
    x = jnp.concatenate([imgs_ref[...],          # img0 | img1         (6)
                         pk_b[:, 4:10],          # i0w | i1w warped    (6)
                         gms_ref[...],           # global mask score   (1)
                         pk_b[:, 0:4],           # merged flow         (4)
                         ctx_ref[...]], axis=-1)  # ctx0 | ctx1        (32)
    y = _mlp_core(x, w1_ref, b1_ref, w2_ref, b2_ref)       # (tn, 3) f32
    o_ref[...] = jnp.clip(y + pk[:, 11:14], 0.0, 1.0)


@functools.lru_cache(maxsize=None)
def _make_merge_kernel(M, dense_out):
    """softmax over M mask scores per side; merge flows & warped imgs; sigmoid mask;
    crude blended image.  Single bf16 input slab [tn, 12M+1] laid out as
    [mf(4M) | ms(2M+1) | w0(3M) | w1(3M)]; per-flow expand/reduce done with tiny
    resident 0/1 selection matmuls (K zero-extended to 128 in registers)."""
    def kernel(slab_ref, e2_ref, r2_ref, e3_ref, r3_ref, o_ref):
        slab = slab_ref[...]
        mf = slab[:, :4 * M].astype(jnp.float32)
        ms = slab[:, 4 * M:6 * M + 1].astype(jnp.float32)
        w = slab[:, 6 * M + 1:].astype(jnp.float32)          # w0|w1 -> 6M lanes

        s0 = ms[:, :M]
        s1 = ms[:, M:2 * M]
        s0 = s0 - jnp.max(s0, axis=-1, keepdims=True)
        s1 = s1 - jnp.max(s1, axis=-1, keepdims=True)
        e0 = jnp.exp(s0)
        e1 = jnp.exp(s1)
        p0 = e0 * pl.reciprocal(jnp.sum(e0, axis=-1, keepdims=True), approx=True)
        p1 = e1 * pl.reciprocal(jnp.sum(e1, axis=-1, keepdims=True), approx=True)
        p = _lanepad(jnp.concatenate([p0, p1], axis=-1).astype(jnp.bfloat16), _LANE)

        pf = jnp.dot(p, e2_ref[...], preferred_element_type=jnp.float32)   # [tn,4M]
        flow = jnp.dot(_lanepad((pf * mf).astype(jnp.bfloat16), _LANE), r2_ref[...],
                       preferred_element_type=jnp.float32)                 # [tn,4]
        pw = jnp.dot(p, e3_ref[...], preferred_element_type=jnp.float32)   # [tn,6M]
        wimg = jnp.dot(_lanepad((pw * w).astype(jnp.bfloat16), _LANE), r3_ref[...],
                       preferred_element_type=jnp.float32)                 # [tn,6]

        i0w = wimg[:, 0:3]
        i1w = wimg[:, 3:6]
        mask = jax.nn.sigmoid(ms[:, 2 * M:2 * M + 1])
        crude = i0w * mask + i1w * (1.0 - mask)
        pad = jnp.zeros((flow.shape[0], 2), jnp.float32)
        packed = jnp.concatenate([flow, i0w, i1w, mask, crude, pad], axis=-1)  # [tn,16]
        if dense_out:
            o_ref[...] = packed.reshape(-1, 128)      # lane-dense store ([tn/8,128])
        else:
            o_ref[...] = packed
    return kernel


# ----------------------------------------------------------------------------
# pallas_call wrappers
# ----------------------------------------------------------------------------
def _rowtiled_mlp_call(kernel, parts, consts, out_cols, out_dtype):
    """parts: [N,c_i] arrays tiled over rows; consts: resident operands (weights /
    selection matrices) with constant index_maps (no re-DMA between grid steps)."""
    N = parts[0].shape[0]
    tn = _choose_tile(N)
    n_pad = _round_up(N, tn)
    parts_p = [_pad_rows(p, n_pad) for p in parts]
    in_specs = ([pl.BlockSpec((tn, p.shape[1]), lambda i: (i, 0)) for p in parts_p]
                + [pl.BlockSpec(c.shape, lambda i: (0, 0)) for c in consts])
    out = pl.pallas_call(
        kernel,
        out_shape=jax.ShapeDtypeStruct((n_pad, out_cols), out_dtype),
        grid_spec=pl.GridSpec(
            grid=(n_pad // tn,), in_specs=in_specs,
            out_specs=pl.BlockSpec((tn, out_cols), lambda i: (i, 0))),
        compiler_params=pltpu.CompilerParams(
            dimension_semantics=("parallel",), vmem_limit_bytes=_VMEM_LIMIT),
    )(*parts_p, *consts)
    return out if n_pad == N else out[:N]


_MERGE_DENSE = {"ok": None}   # cached outcome of the lane-dense-output lowering probe


def merge_and_blend(multiflow, multimask_score, w0_stack, w1_stack, M, sel_mats):
    """multiflow [B,H,W,4M] f32, multimask_score [B,H,W,2M+1] bf16, warped stacks
    [B,H,W,3M] bf16 -> (flow, i0w, i1w, mask, crude) NHWC f32 + packed [N,16] f32."""
    B, H, W, _ = multiflow.shape
    N = B * H * W
    C = 12 * M + 1
    slab = jnp.concatenate(
        [multiflow.astype(jnp.bfloat16), multimask_score.astype(jnp.bfloat16),
         w0_stack.astype(jnp.bfloat16), w1_stack.astype(jnp.bfloat16)],
        axis=-1).reshape(N, C)

    tn = _choose_tile(N)
    n_pad = _round_up(N, tn)
    slab_p = _pad_rows(slab, n_pad)
    e2, r2, e3, r3 = sel_mats
    in_specs = ([pl.BlockSpec((tn, C), lambda i: (i, 0))]
                + [pl.BlockSpec(m.shape, lambda i: (0, 0)) for m in sel_mats])
    cp = pltpu.CompilerParams(dimension_semantics=("parallel",),
                              vmem_limit_bytes=_VMEM_LIMIT)

    def run(dense):
        if dense:
            out_shape = jax.ShapeDtypeStruct((n_pad // 8, 128), jnp.float32)
            out_spec = pl.BlockSpec((tn // 8, 128), lambda i: (i, 0))
        else:
            out_shape = jax.ShapeDtypeStruct((n_pad, 16), jnp.float32)
            out_spec = pl.BlockSpec((tn, 16), lambda i: (i, 0))
        r = pl.pallas_call(
            _make_merge_kernel(M, dense),
            out_shape=out_shape,
            grid_spec=pl.GridSpec(grid=(n_pad // tn,), in_specs=in_specs,
                                  out_specs=out_spec),
            compiler_params=cp,
        )(slab_p, e2, r2, e3, r3)
        return r.reshape(n_pad, 16)       # free (contiguous) reshape wrapper-side

    if _MERGE_DENSE["ok"] is False:
        packed = run(False)
    else:
        try:
            packed = run(True)
            if _MERGE_DENSE["ok"] is None:
                jax.block_until_ready(packed)
                _MERGE_DENSE["ok"] = True
        except Exception:
            # in-kernel (tn,16)->(tn/8,128) reshape not supported here -> plain store
            _MERGE_DENSE["ok"] = False
            packed = run(False)

    packed = packed if n_pad == N else packed[:N]
    flow = packed[:, 0:4].reshape(B, H, W, 4)
    i0w = packed[:, 4:7].reshape(B, H, W, 3)
    i1w = packed[:, 7:10].reshape(B, H, W, 3)
    mask = packed[:, 10:11].reshape(B, H, W, 1)
    crude = packed[:, 11:14].reshape(B, H, W, 3)
    return flow, i0w, i1w, mask, crude, packed


# ----------------------------------------------------------------------------
# JAX glue: batched bilinear backwarp (bf16), multiwarp stacks, parameter init.
# ----------------------------------------------------------------------------
def multi_backwarp(img, flows):
    """img: [B,H,W,C] (bf16); flows: [B,M,H,W,2] f32 (dx, dy).  Bilinear backward
    warp under M flows, corner gathers batched across M; OOB samples are zero.
    TODO(synk): replace with a Pallas scalar-prefetch / double-buffered row gather."""
    B, M, H, W, _ = flows.shape
    C = img.shape[-1]
    xs = jnp.arange(W, dtype=jnp.float32)[None, None, None, :] + flows[..., 0]
    ys = jnp.arange(H, dtype=jnp.float32)[None, None, :, None] + flows[..., 1]
    x0 = jnp.floor(xs)
    y0 = jnp.floor(ys)
    wx1 = xs - x0
    wy1 = ys - y0
    wx0 = 1.0 - wx1
    wy0 = 1.0 - wy1
    flat = img.reshape(B, H * W, C)

    def gather(yi, xi):
        valid = (xi >= 0) & (xi < W) & (yi >= 0) & (yi < H)
        xi_c = jnp.clip(xi, 0, W - 1).astype(jnp.int32)
        yi_c = jnp.clip(yi, 0, H - 1).astype(jnp.int32)
        idx = (yi_c * W + xi_c).reshape(B, M * H * W)
        g = jax.vmap(lambda f, ix: f[ix])(flat, idx).reshape(B, M, H, W, C)
        return g.astype(jnp.float32) * valid[..., None].astype(jnp.float32)

    out = (gather(y0, x0) * (wy0 * wx0)[..., None]
           + gather(y0, x0 + 1) * (wy0 * wx1)[..., None]
           + gather(y0 + 1, x0) * (wy1 * wx0)[..., None]
           + gather(y0 + 1, x0 + 1) * (wy1 * wx1)[..., None])
    return out.astype(img.dtype)


def multiwarp_stacks(img0, img1, multiflow, M):
    """Warp img0 / img1 with their M flows; returns flow-major [B,H,W,3M] (bf16)."""
    B, H, W, _ = multiflow.shape
    f0 = jnp.transpose(multiflow[..., :2 * M].reshape(B, H, W, M, 2), (0, 3, 1, 2, 4))
    f1 = jnp.transpose(multiflow[..., 2 * M:4 * M].reshape(B, H, W, M, 2), (0, 3, 1, 2, 4))
    w0 = multi_backwarp(img0, f0)
    w1 = multi_backwarp(img1, f1)
    w0 = jnp.transpose(w0, (0, 2, 3, 1, 4)).reshape(B, H, W, 3 * M)
    w1 = jnp.transpose(w1, (0, 2, 3, 1, 4)).reshape(B, H, W, 3 * M)
    return w0, w1


def init_mlp(seed, cin, hidden, cout):
    """Deterministic params.  w1 is stored K-padded to 128 rows (tiny, resident) so
    the first dot is a fully aligned (tn,128)x(128,128) bf16 pass; w2/b2 stay at the
    natural output width (no padded output stores)."""
    kpad = _round_up(cin, _LANE)
    k = jax.random.PRNGKey(seed)
    k1, k2, k3 = jax.random.split(k, 3)
    w1 = jax.random.normal(k1, (cin, hidden), jnp.float32) * (1.0 / jnp.sqrt(cin))
    w1p = jnp.zeros((kpad, hidden), jnp.float32).at[:cin].set(w1)
    b1 = 0.01 * jax.random.normal(k3, (1, hidden), jnp.float32)
    w2 = jax.random.normal(k2, (hidden, cout), jnp.float32) * (0.1 / jnp.sqrt(hidden))
    b2 = jnp.zeros((1, cout), jnp.float32)
    return dict(w1=w1p.astype(jnp.bfloat16), b1=b1,
                w2=w2.astype(jnp.bfloat16), b2=b2,
                cin=cin, kpad=kpad, cout=cout, hidden=hidden)


def _selection_mats(M):
    """0/1 selection matrices for the merge kernel, K-padded to 128 rows, bf16."""
    K = _LANE

    def expand(g):   # [K, g*2M]: E[r,c] = 1 iff c//g == r   (rows >= 2M all-zero)
        r = jnp.arange(K)[:, None]
        c = jnp.arange(g * 2 * M)[None, :]
        return ((c // g) == r).astype(jnp.bfloat16)

    def reduce(g):   # [K, 2g]: R[k,j] = 1 iff j == k%g + g*(k//(g*M)), k < g*2M
        k = jnp.arange(K)[:, None]
        j = jnp.arange(2 * g)[None, :]
        valid = k < g * 2 * M
        return (((k % g + g * (k // (g * M))) == j) & valid).astype(jnp.bfloat16)

    return expand(2), reduce(2), expand(3), reduce(3)


def ifblock_apply(params, blk_imgs_bf, gms_bf, flow_f32, scale, M):
    """IFBlock stand-in: downscale inputs (bf16 glue), Pallas per-pixel MLP on the
    natural-width components, upscale & rescale flow.  Returns bf16 (mf_d, ms_d)."""
    B, H, W, Ci = blk_imgs_bf.shape
    hs, ws = H // scale, W // scale
    flow_bf = flow_f32.astype(jnp.bfloat16)
    if scale != 1:
        imgs_s = jax.image.resize(blk_imgs_bf, (B, hs, ws, Ci), method="bilinear")
        gms_s = jax.image.resize(gms_bf, (B, hs, ws, 1), method="bilinear")
        flow_s = jax.image.resize(flow_bf, (B, hs, ws, 4), method="bilinear") * (1.0 / scale)
    else:
        imgs_s, gms_s, flow_s = blk_imgs_bf, gms_bf, flow_bf

    N = B * hs * ws
    out = _rowtiled_mlp_call(
        _ifblock_kernel,
        [imgs_s.reshape(N, Ci), gms_s.reshape(N, 1), flow_s.reshape(N, 4)],
        [params["w1"], params["b1"], params["w2"], params["b2"]],
        out_cols=params["cout"], out_dtype=jnp.bfloat16,
    ).reshape(B, hs, ws, params["cout"])

    mf_d = out[..., :4 * M]
    ms_d = out[..., 4 * M:]
    if scale != 1:
        mf_d = jax.image.resize(mf_d, (B, H, W, 4 * M), method="bilinear") * float(scale)
        ms_d = jax.image.resize(ms_d, (B, H, W, ms_d.shape[-1]), method="bilinear")
    return mf_d, ms_d


# ----------------------------------------------------------------------------
# Model
# ----------------------------------------------------------------------------
class IFNetRAFTPallas:
    """Pallas re-implementation of IFNet_RAFT.forward (esti_sofi=False path)."""

    def __init__(self, multi=(8, 8, 4), ctx_dim=16, hidden=128):
        self.Ms = multi
        self.ctx_dim = ctx_dim
        M0, M1, M2 = multi
        # block i input channels: imgs (6 or 12) + global_mask_score (1) + flow (4)
        self.block_params = [
            init_mlp(1, 6 + 1 + 4, hidden, 6 * M0 + 1),
            init_mlp(2, 12 + 1 + 4, hidden, 6 * M1 + 1),
            init_mlp(3, 12 + 1 + 4, hidden, 6 * M2 + 1),
        ]
        Ml = multi[-1]
        self.ctx_params = init_mlp(4, 3 + 2 * Ml + Ml, hidden, ctx_dim)
        self.unet_params = init_mlp(5, 6 + 6 + 1 + 4 + 2 * ctx_dim, hidden, 3)
        self._sel_cache = {}

    def _sel(self, M):
        if M not in self._sel_cache:
            self._sel_cache[M] = _selection_mats(M)
        return self._sel_cache[M]

    def _contextnet_pair(self, img0_bf, img1_bf, multiflow, multimask_score, M):
        """Both context calls share weights -> one pallas_call emitting ctx0|ctx1."""
        B, H, W, _ = img0_bf.shape
        N = B * H * W
        p = self.ctx_params
        return _rowtiled_mlp_call(
            _make_context_kernel(M),
            [img0_bf.reshape(N, 3), img1_bf.reshape(N, 3),
             multiflow.reshape(N, 4 * M),
             multimask_score.reshape(N, 2 * M + 1)],
            [p["w1"], p["b1"], p["w2"], p["b2"]],
            out_cols=2 * self.ctx_dim, out_dtype=jnp.bfloat16)       # [N, 2*ctx_dim]

    def _unet_refine(self, imgs_bf, gms_bf, packed2d, ctx2d, B, H, W):
        """Unet residual MLP fused with refined = clamp(crude + residual, 0, 1);
        the merge kernel's packed [N,16] output is used directly (flow/warps/crude)."""
        N = B * H * W
        p = self.unet_params
        refined = _rowtiled_mlp_call(
            _unet_kernel,
            [imgs_bf.reshape(N, 6), gms_bf.reshape(N, 1), packed2d, ctx2d],
            [p["w1"], p["b1"], p["w2"], p["b2"]],
            out_cols=3, out_dtype=jnp.float32)
        return refined.reshape(B, H, W, 3)

    def forward(self, imgs_nchw, mid_gt_nchw, scale_list=(4, 2, 1), timestep=0.5):
        # NCHW (PyTorch convention) -> NHWC for the kernels; bf16 activation path.
        imgs_f32 = jnp.transpose(imgs_nchw, (0, 2, 3, 1)).astype(jnp.float32)
        imgs_bf = imgs_f32.astype(jnp.bfloat16)
        img0_bf = imgs_bf[..., :3]
        img1_bf = imgs_bf[..., 3:6]
        B, H, W, _ = img0_bf.shape

        NS = len(scale_list)
        flow_list = [None] * NS
        sofi_flow_list = []                         # esti_sofi=False -> 0 loops
        mask_list = [None] * NS
        crude_img_list = [None] * (NS + 2)
        refined_img_list = [None] * (NS + 2)

        multiflow = None
        multimask_score = None
        packed2d = None
        img0_warped_bf = img1_warped_bf = None
        gms = None
        flow = None

        for i in range(NS):
            M = self.Ms[i]
            if i == 0:
                blk_imgs = imgs_bf                               # img0 | img1
                gms = jnp.zeros((B, H, W, 1), jnp.bfloat16)
                flow = jnp.zeros((B, H, W, 4), jnp.float32)
            else:
                blk_imgs = jnp.concatenate(
                    [img0_bf, img0_warped_bf, img1_bf, img1_warped_bf], axis=-1)

            mf_d, ms_d = ifblock_apply(self.block_params[i], blk_imgs, gms, flow,
                                       scale=scale_list[i], M=M)
            mf_d = mf_d.astype(jnp.float32)          # accumulate multiflow in f32
            if i == 0:
                multiflow = mf_d
            else:
                Mp, Mc = self.Ms[i - 1], self.Ms[i]
                if Mp == Mc:
                    skip = multiflow
                elif Mp > Mc:
                    skip = jnp.concatenate(
                        [multiflow[..., :2 * Mc],
                         multiflow[..., 2 * Mp:2 * Mp + 2 * Mc]], axis=-1)
                else:
                    raise ValueError("Mp < Mc not supported (matches debug() branch)")
                multiflow = skip + mf_d
            multimask_score = ms_d                               # bf16

            # batched bilinear backwarp glue + fused merge/blend Pallas kernel
            w0_stack, w1_stack = multiwarp_stacks(img0_bf, img1_bf, multiflow, M)
            flow, i0w, i1w, mask, crude, packed2d = merge_and_blend(
                multiflow, multimask_score, w0_stack, w1_stack, M, self._sel(M))

            gms = multimask_score[..., -1:]          # raw (pre-sigmoid) global score
            flow_list[i] = flow
            mask_list[i] = mask
            crude_img_list[i] = crude
            img0_warped_bf = i0w.astype(jnp.bfloat16)
            img1_warped_bf = i1w.astype(jnp.bfloat16)

        # TODO(synk): block_tea / distillation branch not implemented (mid_gt has
        #             != 3 channels here, so the reference skips it too).
        flow_tea = None
        merged_tea = None
        loss_distill = 0.0

        M = self.Ms[-1]
        ctx2d = self._contextnet_pair(img0_bf, img1_bf, multiflow, multimask_score, M)
        refined = self._unet_refine(imgs_bf, gms, packed2d, ctx2d, B, H, W)
        refined_img_list[NS - 1] = refined

        def to_nchw(x):
            return None if x is None else jnp.transpose(x, (0, 3, 1, 2))

        flow_list = [to_nchw(f) for f in flow_list]
        mask_last = to_nchw(mask_list[-1])
        crude_img_list = [to_nchw(c) for c in crude_img_list]
        refined_img_list = [to_nchw(r) for r in refined_img_list]
        teacher_dict = {"flow_teacher": flow_tea, "merged_teacher": merged_tea}

        return (flow_list, sofi_flow_list, mask_last, crude_img_list,
                refined_img_list, teacher_dict, loss_distill)


# ----------------------------------------------------------------------------
if __name__ == "__main__":
    key = jax.random.PRNGKey(0)
    k_imgs, k_gt = jax.random.split(key)

    B, H, W = 2, 16, 16
    imgs = jax.random.uniform(k_imgs, (B, 6, H, W), dtype=jnp.float32)   # two RGB frames, NCHW
    mid_gt = jax.random.uniform(k_gt, (B, 1, H, W), dtype=jnp.float32)   # !=3 ch -> no distillation

    model = IFNetRAFTPallas(multi=(8, 8, 4))
    (flow_list, sofi_flow_list, mask, crude_img_list,
     refined_img_list, teacher_dict, loss_distill) = model.forward(
        imgs, mid_gt, scale_list=[4, 2, 1])

    jax.block_until_ready(flow_list[-1])
    jax.block_until_ready(refined_img_list[2])
    jax.block_until_ready(mask)

    assert flow_list[-1].shape == (B, 4, H, W)
    assert refined_img_list[2].shape == (B, 3, H, W)
    assert mask.shape == (B, 1, H, W)
    assert bool(jnp.all(jnp.isfinite(flow_list[-1])))
    assert bool(jnp.all((refined_img_list[2] >= 0.0) & (refined_img_list[2] <= 1.0)))
    print("KERNEL_OK")
</pallas_src>

<mosaic_0001>
module attributes {stable_mosaic.version = 11 : i64} {
  func.func @_ifblock_kernel(%arg0: i32, %arg1: memref<64x6xbf16, #tpu.memory_space<vmem>>, %arg2: memref<64x1xbf16, #tpu.memory_space<vmem>>, %arg3: memref<64x4xbf16, #tpu.memory_space<vmem>>, %arg4: memref<128x128xbf16, #tpu.memory_space<vmem>>, %arg5: memref<1x128xf32, #tpu.memory_space<vmem>>, %arg6: memref<128x49xbf16, #tpu.memory_space<vmem>>, %arg7: memref<1x49xf32, #tpu.memory_space<vmem>>, %arg8: memref<64x49xbf16, #tpu.memory_space<vmem>>) attributes {dimension_semantics = [#tpu.dimension_semantics<parallel>], iteration_bounds = array<i64: 1>, scalar_prefetch = 0 : i64, scratch_operands = 0 : i64, tpu.core_type = #tpu.core_type<tc>, window_params = [{transform_indices = @transform_0, window_bounds = array<i64: 64, 6>}, {transform_indices = @transform_1, window_bounds = array<i64: 64, 1>}, {transform_indices = @transform_2, window_bounds = array<i64: 64, 4>}, {pipeline_mode = #tpu.pipeline_mode<synchronous>, transform_indices = @transform_3, window_bounds = array<i64: 128, 128>}, {pipeline_mode = #tpu.pipeline_mode<synchronous>, transform_indices = @transform_4, window_bounds = array<i64: 1, 128>}, {pipeline_mode = #tpu.pipeline_mode<synchronous>, transform_indices = @transform_5, window_bounds = array<i64: 128, 49>}, {pipeline_mode = #tpu.pipeline_mode<synchronous>, transform_indices = @transform_6, window_bounds = array<i64: 1, 49>}, {transform_indices = @transform_7, window_bounds = array<i64: 64, 49>}]} {
    %c0 = arith.constant 0 : index
    %c0_0 = arith.constant 0 : index
    %0 = vector.load %arg1[%c0, %c0_0] : memref<64x6xbf16, #tpu.memory_space<vmem>>, vector<64x6xbf16>
    %c0_1 = arith.constant 0 : index
    %c0_2 = arith.constant 0 : index
    %1 = vector.load %arg2[%c0_1, %c0_2] : memref<64x1xbf16, #tpu.memory_space<vmem>>, vector<64x1xbf16>
    %c0_3 = arith.constant 0 : index
    %c0_4 = arith.constant 0 : index
    %2 = vector.load %arg3[%c0_3, %c0_4] : memref<64x4xbf16, #tpu.memory_space<vmem>>, vector<64x4xbf16>
    %3 = tpu.concatenate %0, %1, %2 in 1 : vector<64x6xbf16>, vector<64x1xbf16>, vector<64x4xbf16> -> vector<64x11xbf16>
    %cst = arith.constant 0.000000e+00 : bf16
    %4 = vector.broadcast %cst : bf16 to vector<64x117xbf16>
    %5 = tpu.concatenate %3, %4 in 1 : vector<64x11xbf16>, vector<64x117xbf16> -> vector<64x128xbf16>
    %c0_5 = arith.constant 0 : index
    %c0_6 = arith.constant 0 : index
    %6 = vector.load %arg4[%c0_5, %c0_6] : memref<128x128xbf16, #tpu.memory_space<vmem>>, vector<128x128xbf16>
    %cst_7 = arith.constant dense<0.000000e+00> : vector<64x128xf32>
    %7 = tpu.matmul %5, %6, %cst_7 {dimension_numbers = #tpu.dot_dimension_numbers<[1], [0], [0], [1], [0, 0, 1, 1], [], []>} : vector<64x128xbf16>, vector<128x128xbf16>, vector<64x128xf32> -> vector<64x128xf32>
    %c0_8 = arith.constant 0 : index
    %c0_9 = arith.constant 0 : index
    %8 = vector.load %arg5[%c0_8, %c0_9] : memref<1x128xf32, #tpu.memory_space<vmem>>, vector<1x128xf32>
    %9 = vector.broadcast %8 : vector<1x128xf32> to vector<64x128xf32>
    %10 = arith.addf %7, %9 : vector<64x128xf32>
    %cst_10 = arith.constant 0.000000e+00 : f32
    %11 = vector.broadcast %cst_10 : f32 to vector<64x128xf32>
    %12 = arith.maximumf %10, %11 : vector<64x128xf32>
    %13 = arith.truncf %12 : vector<64x128xf32> to vector<64x128xbf16>
    %c0_11 = arith.constant 0 : index
    %c0_12 = arith.constant 0 : index
    %14 = vector.load %arg6[%c0_11, %c0_12] : memref<128x49xbf16, #tpu.memory_space<vmem>>, vector<128x49xbf16>
    %cst_13 = arith.constant dense<0.000000e+00> : vector<64x49xf32>
    %15 = tpu.matmul %13, %14, %cst_13 {dimension_numbers = #tpu.dot_dimension_numbers<[1], [0], [0], [1], [0, 0, 1, 1], [], []>} : vector<64x128xbf16>, vector<128x49xbf16>, vector<64x49xf32> -> vector<64x49xf32>
    %c0_14 = arith.constant 0 : index
    %c0_15 = arith.constant 0 : index
    %16 = vector.load %arg7[%c0_14, %c0_15] : memref<1x49xf32, #tpu.memory_space<vmem>>, vector<1x49xf32>
    %17 = vector.broadcast %16 : vector<1x49xf32> to vector<64x49xf32>
    %18 = arith.addf %15, %17 : vector<64x49xf32>
    %19 = arith.truncf %18 : vector<64x49xf32> to vector<64x49xbf16>
    %c0_16 = arith.constant 0 : index
    %c0_17 = arith.constant 0 : index
    %20 = vector.load %arg8[%c0_16, %c0_17] : memref<64x49xbf16, #tpu.memory_space<vmem>>, vector<64x49xbf16>
    tpu.vector_store %arg8[%c0_16, %c0_17], %19 {strides = array<i32>} : memref<64x49xbf16, #tpu.memory_space<vmem>>, vector<64x49xbf16>,
    return
  }
  func.func @transform_0(%arg0: i32) -> (i32, i32) {
    %c0_i32 = arith.constant 0 : i32
    %c0_i32_0 = arith.constant 0 : i32
    return %arg0, %c0_i32 : i32, i32
  }
  func.func @transform_1(%arg0: i32) -> (i32, i32) {
    %c0_i32 = arith.constant 0 : i32
    %c0_i32_0 = arith.constant 0 : i32
    return %arg0, %c0_i32 : i32, i32
  }
  func.func @transform_2(%arg0: i32) -> (i32, i32) {
    %c0_i32 = arith.constant 0 : i32
    %c0_i32_0 = arith.constant 0 : i32
    return %arg0, %c0_i32 : i32, i32
  }
  func.func @transform_3(%arg0: i32) -> (i32, i32) {
    %c0_i32 = arith.constant 0 : i32
    %c0_i32_0 = arith.constant 0 : i32
    %c0_i32_1 = arith.constant 0 : i32
    return %c0_i32, %c0_i32_0 : i32, i32
  }
  func.func @transform_4(%arg0: i32) -> (i32, i32) {
    %c0_i32 = arith.constant 0 : i32
    %c0_i32_0 = arith.constant 0 : i32
    %c0_i32_1 = arith.constant 0 : i32
    return %c0_i32, %c0_i32_0 : i32, i32
  }
  func.func @transform_5(%arg0: i32) -> (i32, i32) {
    %c0_i32 = arith.constant 0 : i32
    %c0_i32_0 = arith.constant 0 : i32
    %c0_i32_1 = arith.constant 0 : i32
    return %c0_i32, %c0_i32_0 : i32, i32
  }
  func.func @transform_6(%arg0: i32) -> (i32, i32) {
    %c0_i32 = arith.constant 0 : i32
    %c0_i32_0 = arith.constant 0 : i32
    %c0_i32_1 = arith.constant 0 : i32
    return %c0_i32, %c0_i32_0 : i32, i32
  }
  func.func @transform_7(%arg0: i32) -> (i32, i32) {
    %c0_i32 = arith.constant 0 : i32
    %c0_i32_0 = arith.constant 0 : i32
    return %arg0, %c0_i32 : i32, i32
  }
}

</mosaic_0001>

<llo_original>
// kernel: tpu_custom_call.1
$region0: #{tpu_custom_call.1}
  #allocation0 [shape = 'u32[]', space=smem, size = 0x4, offset = 0x4, fixed_abs, tag = 'smem constant byte address 0x4 - core index']
  #allocation1 [shape = 'u32[72,128]{1,0:T(1,128)}', space=vmem, size = 0x9000, scoped, tag = 'internal scratch']
  %s0 = inlined_call_operand.vmem [shape: bf16[64,6], index: 0, kind: input, shape index: {}]
  %s1 = inlined_call_operand.vmem [shape: bf16[64,1], index: 1, kind: input, shape index: {}]
  %s2 = inlined_call_operand.vmem [shape: bf16[64,4], index: 2, kind: input, shape index: {}]
  %s3 = inlined_call_operand.vmem [shape: bf16[128,128], index: 3, kind: input, shape index: {}]
  %s4 = inlined_call_operand.vmem [shape: f32[1,128], index: 4, kind: input, shape index: {}]
  %s5 = inlined_call_operand.vmem [shape: bf16[128,49], index: 5, kind: input, shape index: {}]
  %s6 = inlined_call_operand.vmem [shape: f32[1,49], index: 6, kind: input, shape index: {}]
  %s7 = inlined_call_operand.vmem [shape: bf16[64,49], index: 7, kind: output, shape index: {}]
  %s8 = sld [smem:[#allocation0]]
  $region38: #{tpu_custom_call.1} parent=0
    _
  %s10 = ssub.s32 1, %s8
  %s11 = scalar_select 0, %s10, %s8
  // Predicated region
  $region2: #{tpu_custom_call.1} parent=0 // pred_check
    _
  $region3: #{tpu_custom_call.1} parent=0 // pred_check_branch
    %13 = sbr.rel (0) target = $region5
  $region4: #{tpu_custom_call.1} parent=0 // pred_region
    _
  $region5: #{tpu_custom_call.1} parent=0 // pred_fallthru
    _
  // Predicated region
  $region6: #{tpu_custom_call.1} parent=0 // pred_check
    _
  $region7: #{tpu_custom_call.1} parent=0 // pred_check_branch
    %15 = sbr.rel (0) target = $region9
  $region8: #{tpu_custom_call.1} parent=0 // pred_region
    _
  $region9: #{tpu_custom_call.1} parent=0 // pred_fallthru
    _
  // Predicated region
  $region10: #{tpu_custom_call.1} parent=0 // pred_check
    _
  $region11: #{tpu_custom_call.1} parent=0 // pred_check_branch
    %17 = sbr.rel (0) target = $region13
  $region12: #{tpu_custom_call.1} parent=0 // pred_region
    _
  $region13: #{tpu_custom_call.1} parent=0 // pred_fallthru
    _
  // Predicated region
  $region14: #{tpu_custom_call.1} parent=0 // pred_check
    _
  $region15: #{tpu_custom_call.1} parent=0 // pred_check_branch
    %19 = sbr.rel (0) target = $region17
  $region16: #{tpu_custom_call.1} parent=0 // pred_region
    _
  $region17: #{tpu_custom_call.1} parent=0 // pred_fallthru
    _
  // Predicated region
  $region18: #{tpu_custom_call.1} parent=0 // pred_check
    _
  $region19: #{tpu_custom_call.1} parent=0 // pred_check_branch
    %21 = sbr.rel (0) target = $region21
  $region20: #{tpu_custom_call.1} parent=0 // pred_region
    _
  $region21: #{tpu_custom_call.1} parent=0 // pred_fallthru
    _
  // Predicated region
  $region22: #{tpu_custom_call.1} parent=0 // pred_check
    _
  $region23: #{tpu_custom_call.1} parent=0 // pred_check_branch
    %23 = sbr.rel (0) target = $region25
  $region24: #{tpu_custom_call.1} parent=0 // pred_region
    _
  $region25: #{tpu_custom_call.1} parent=0 // pred_fallthru
    _
  // Predicated region
  $region26: #{tpu_custom_call.1} parent=0 // pred_check
    _
  $region27: #{tpu_custom_call.1} parent=0 // pred_check_branch
    %25 = sbr.rel (0) target = $region29
  $region28: #{tpu_custom_call.1} parent=0 // pred_region
    _
  $region29: #{tpu_custom_call.1} parent=0 // pred_fallthru
    _
  %v27 = vld [vmem:[%s0] sm:$0xf]
  %v28 = vld [vmem:[%s0 + $0x4] sm:$0xf]
  %v29 = vld [vmem:[%s0 + $0x8] sm:$0xf]
  %v30 = vld [vmem:[%s0 + $0xc] sm:$0xf]
  %v31 = vld [vmem:[%s0 + $0x10] sm:$0xf]
  %v32 = vld [vmem:[%s0 + $0x14] sm:$0xf]
  %v33 = vld [vmem:[%s0 + $0x18] sm:$0xf]
  %v34 = vld [vmem:[%s0 + $0x1c] sm:$0xf]
  %v35 = vld [vmem:[%s1] sm:$0xf]
  %v36 = vld [vmem:[%s1 + $0x4] sm:$0xf]
  %v37 = vld [vmem:[%s1 + $0x8] sm:$0xf]
  %v38 = vld [vmem:[%s1 + $0xc] sm:$0xf]
  %v39 = vld [vmem:[%s1 + $0x10] sm:$0xf]
  %v40 = vld [vmem:[%s1 + $0x14] sm:$0xf]
  %v41 = vld [vmem:[%s1 + $0x18] sm:$0xf]
  %v42 = vld [vmem:[%s1 + $0x1c] sm:$0xf]
  %v43 = vld [vmem:[%s2] sm:$0xf]
  %v44 = vld [vmem:[%s2 + $0x4] sm:$0xf]
  %v45 = vld [vmem:[%s2 + $0x8] sm:$0xf]
  %v46 = vld [vmem:[%s2 + $0xc] sm:$0xf]
  %v47 = vld [vmem:[%s2 + $0x10] sm:$0xf]
  %v48 = vld [vmem:[%s2 + $0x14] sm:$0xf]
  %v49 = vld [vmem:[%s2 + $0x18] sm:$0xf]
  %v50 = vld [vmem:[%s2 + $0x1c] sm:$0xf]
  %v59 = vunpack.c.l.b16 %v27
  %v60 = vunpack.c.l.b16 %v28
  %v61 = vunpack.c.l.b16 %v29
  %v62 = vunpack.c.l.b16 %v30
  %v63 = vunpack.c.l.b16 %v31
  %v64 = vunpack.c.l.b16 %v32
  %v65 = vunpack.c.l.b16 %v33
  %v66 = vunpack.c.l.b16 %v34
  %v67 = vpack.c.b16 %v60, %v59
  %v68 = vpack.c.b16 %v62, %v61
  %v69 = vpack.c.b16 %v64, %v63
  %v70 = vpack.c.b16 %v66, %v65
  %v79 = vunpack.c.l.b16 %v35
  %v80 = vunpack.c.l.b16 %v36
  %v81 = vunpack.c.l.b16 %v37
  %v82 = vunpack.c.l.b16 %v38
  %v83 = vunpack.c.l.b16 %v39
  %v84 = vunpack.c.l.b16 %v40
  %v85 = vunpack.c.l.b16 %v41
  %v86 = vunpack.c.l.b16 %v42
  %v87 = vpack.c.b16 %v80, %v79
  %v88 = vpack.c.b16 %v82, %v81
  %v89 = vpack.c.b16 %v84, %v83
  %v90 = vpack.c.b16 %v86, %v85
  %91 = vrot.lane.b32.xlu0 %v87, 6
  %v92 = vpop.permute.xlu0 %91
  %93 = vrot.lane.b32.xlu0 %v88, 6
  %v94 = vpop.permute.xlu0 %93
  %95 = vrot.lane.b32.xlu0 %v89, 6
  %v96 = vpop.permute.xlu0 %95
  %97 = vrot.lane.b32.xlu0 %v90, 6
  %v98 = vpop.permute.xlu0 %97
  %v107 = vunpack.c.l.b16 %v43
  %v108 = vunpack.c.l.b16 %v44
  %v109 = vunpack.c.l.b16 %v45
  %v110 = vunpack.c.l.b16 %v46
  %v111 = vunpack.c.l.b16 %v47
  %v112 = vunpack.c.l.b16 %v48
  %v113 = vunpack.c.l.b16 %v49
  %v114 = vunpack.c.l.b16 %v50
  %v115 = vpack.c.b16 %v108, %v107
  %v116 = vpack.c.b16 %v110, %v109
  %v117 = vpack.c.b16 %v112, %v111
  %v118 = vpack.c.b16 %v114, %v113
  %119 = vrot.lane.b32.xlu0 %v115, 7
  %v120 = vpop.permute.xlu0 %119
  %121 = vrot.lane.b32.xlu0 %v116, 7
  %v122 = vpop.permute.xlu0 %121
  %123 = vrot.lane.b32.xlu0 %v117, 7
  %v124 = vpop.permute.xlu0 %123
  %125 = vrot.lane.b32.xlu0 %v118, 7
  %v126 = vpop.permute.xlu0 %125
  %vm127 = vcmask 48128
  %v130 = vsel %vm127, %v67, %v92
  %v133 = vsel %vm127, %v68, %v94
  %v136 = vsel %vm127, %v69, %v96
  %v139 = vsel %vm127, %v70, %v98
  %vm140 = vcmask 56320
  %v142 = vsel %vm140, %v130, %v120
  %v144 = vsel %vm140, %v133, %v122
  %v146 = vsel %vm140, %v136, %v124
  %v148 = vsel %vm140, %v139, %v126
  %vm149 = vcmask 89088
  %v151 = vsel %vm149, %v142, 0
  %v153 = vsel %vm149, %v144, 0
  %v155 = vsel %vm149, %v146, 0
  %v157 = vsel %vm149, %v148, 0
  %v159 = vld [vmem:[%s3] sm:$0xf]
  %v160 = vld [vmem:[%s3 + $0x4] sm:$0xf]
  %v161 = vld [vmem:[%s3 + $0x8] sm:$0xf]
  %v162 = vld [vmem:[%s3 + $0xc] sm:$0xf]
  %v163 = vld [vmem:[%s3 + $0x10] sm:$0xf]
  %v164 = vld [vmem:[%s3 + $0x14] sm:$0xf]
  %v165 = vld [vmem:[%s3 + $0x18] sm:$0xf]
  %v166 = vld [vmem:[%s3 + $0x1c] sm:$0xf]
  %v167 = vld [vmem:[%s3 + $0x20] sm:$0xf]
  %v168 = vld [vmem:[%s3 + $0x24] sm:$0xf]
  %v169 = vld [vmem:[%s3 + $0x28] sm:$0xf]
  %v170 = vld [vmem:[%s3 + $0x2c] sm:$0xf]
  %v171 = vld [vmem:[%s3 + $0x30] sm:$0xf]
  %v172 = vld [vmem:[%s3 + $0x34] sm:$0xf]
  %v173 = vld [vmem:[%s3 + $0x38] sm:$0xf]
  %v174 = vld [vmem:[%s3 + $0x3c] sm:$0xf]
  %v175 = vld [vmem:[%s4] sm:$0x1]
  %v177 = vperm.slane %v175, 0
  %v195 = vunpack.c.l.b16 %v159
  %v196 = vunpack.c.l.b16 %v160
  %v197 = vunpack.c.l.b16 %v161
  %v198 = vunpack.c.l.b16 %v162
  %v199 = vunpack.c.l.b16 %v163
  %v200 = vunpack.c.l.b16 %v164
  %v201 = vunpack.c.l.b16 %v165
  %v202 = vunpack.c.l.b16 %v166
  %v203 = vunpack.c.l.b16 %v167
  %v204 = vunpack.c.l.b16 %v168
  %v205 = vunpack.c.l.b16 %v169
  %v206 = vunpack.c.l.b16 %v170
  %v207 = vunpack.c.l.b16 %v171
  %v208 = vunpack.c.l.b16 %v172
  %v209 = vunpack.c.l.b16 %v173
  %v210 = vunpack.c.l.b16 %v174
  %v211 = vpack.c.b16 %v196, %v195
  %v212 = vpack.c.b16 %v198, %v197
  %v213 = vpack.c.b16 %v200, %v199
  %v214 = vpack.c.b16 %v202, %v201
  %v215 = vpack.c.b16 %v204, %v203
  %v216 = vpack.c.b16 %v206, %v205
  %v217 = vpack.c.b16 %v208, %v207
  %v218 = vpack.c.b16 %v210, %v209
  %227 = vmatpush.bf16.msra.mxu0 %v218
  %228 = vmatpush.bf16.msra.mxu0 %v217
  %229 = vmatpush.bf16.msra.mxu0 %v216
  %230 = vmatpush.bf16.msra.mxu0 %v215
  %231 = vmatpush.bf16.msra.mxu0 %v214
  %232 = vmatpush.bf16.msra.mxu0 %v213
  %233 = vmatpush.bf16.msra.mxu0 %v212
  %234 = vmatpush.bf16.msra.mxu0 %v211
  %235 = vmatmul.bf16.gmra.mxu0 %v151
  %v236 = vpop.f32.mrf.mxu0
  %v237 = vadd.f32 %v177, %v236
  %v238 = vpop.f32.mrf.mxu0
  %v239 = vadd.f32 %v177, %v238
  %240 = vmatmul.bf16.gmra.mxu0 %v153
  %v241 = vpop.f32.mrf.mxu0
  %v242 = vadd.f32 %v177, %v241
  %v243 = vpop.f32.mrf.mxu0
  %v244 = vadd.f32 %v177, %v243
  %245 = vmatmul.bf16.gmra.mxu0 %v155
  %v246 = vpop.f32.mrf.mxu0
  %v247 = vadd.f32 %v177, %v246
  %v248 = vpop.f32.mrf.mxu0
  %v249 = vadd.f32 %v177, %v248
  %250 = vmatmul.bf16.gmra.mxu0 %v157
  %v251 = vpop.f32.mrf.mxu0
  %v252 = vadd.f32 %v177, %v251
  %v253 = vpop.f32.mrf.mxu0
  %v254 = vadd.f32 %v177, %v253
  %255 = vdwg.mxu0
  %v256 = vmax.f32 %v237, 0.0
  %v257 = vmax.f32 %v239, 0.0
  %v258 = vmax.f32 %v242, 0.0
  %v259 = vmax.f32 %v244, 0.0
  %v260 = vmax.f32 %v247, 0.0
  %v261 = vmax.f32 %v249, 0.0
  %v262 = vmax.f32 %v252, 0.0
  %v263 = vmax.f32 %v254, 0.0
  %v264 = vpack.c.bf16 %v257, %v256
  %v265 = vpack.c.bf16 %v259, %v258
  %v266 = vpack.c.bf16 %v261, %v260
  %v267 = vpack.c.bf16 %v263, %v262
  %v268 = vld [vmem:[%s5] sm:$0xf]
  %v269 = vld [vmem:[%s5 + $0x4] sm:$0xf]
  %v270 = vld [vmem:[%s5 + $0x8] sm:$0xf]
  %v271 = vld [vmem:[%s5 + $0xc] sm:$0xf]
  %v272 = vld [vmem:[%s5 + $0x10] sm:$0xf]
  %v273 = vld [vmem:[%s5 + $0x14] sm:$0xf]
  %v274 = vld [vmem:[%s5 + $0x18] sm:$0xf]
  %v275 = vld [vmem:[%s5 + $0x1c] sm:$0xf]
  %v276 = vld [vmem:[%s5 + $0x20] sm:$0xf]
  %v277 = vld [vmem:[%s5 + $0x24] sm:$0xf]
  %v278 = vld [vmem:[%s5 + $0x28] sm:$0xf]
  %v279 = vld [vmem:[%s5 + $0x2c] sm:$0xf]
  %v280 = vld [vmem:[%s5 + $0x30] sm:$0xf]
  %v281 = vld [vmem:[%s5 + $0x34] sm:$0xf]
  %v282 = vld [vmem:[%s5 + $0x38] sm:$0xf]
  %v283 = vld [vmem:[%s5 + $0x3c] sm:$0xf]
  %v284 = vld [vmem:[%s6] sm:$0x1]
  %v286 = vperm.slane %v284, 0
  %v304 = vunpack.c.l.b16 %v268
  %v305 = vunpack.c.l.b16 %v269
  %v306 = vunpack.c.l.b16 %v270
  %v307 = vunpack.c.l.b16 %v271
  %v308 = vunpack.c.l.b16 %v272
  %v309 = vunpack.c.l.b16 %v273
  %v310 = vunpack.c.l.b16 %v274
  %v311 = vunpack.c.l.b16 %v275
  %v312 = vunpack.c.l.b16 %v276
  %v313 = vunpack.c.l.b16 %v277
  %v314 = vunpack.c.l.b16 %v278
  %v315 = vunpack.c.l.b16 %v279
  %v316 = vunpack.c.l.b16 %v280
  %v317 = vunpack.c.l.b16 %v281
  %v318 = vunpack.c.l.b16 %v282
  %v319 = vunpack.c.l.b16 %v283
  %v320 = vpack.c.b16 %v305, %v304
  %v321 = vpack.c.b16 %v307, %v306
  %v322 = vpack.c.b16 %v309, %v308
  %v323 = vpack.c.b16 %v311, %v310
  %v324 = vpack.c.b16 %v313, %v312
  %v325 = vpack.c.b16 %v315, %v314
  %v326 = vpack.c.b16 %v317, %v316
  %v327 = vpack.c.b16 %v319, %v318
  %336 = vmatpush.bf16.msra.mxu0 %v327
  %337 = vmatpush.bf16.msra.mxu0 %v326
  %338 = vmatpush.bf16.msra.mxu0 %v325
  %339 = vmatpush.bf16.msra.mxu0 %v324
  %340 = vmatpush.bf16.msra.mxu0 %v323
  %341 = vmatpush.bf16.msra.mxu0 %v322
  %342 = vmatpush.bf16.msra.mxu0 %v321
  %343 = vmatpush.bf16.msra.mxu0 %v320
  %344 = vmatmul.bf16.gmra.mxu0 %v264
  %v345 = vpop.f32.mrf.mxu0
  %v346 = vadd.f32 %v286, %v345
  %v347 = vpop.f32.mrf.mxu0
  %v348 = vadd.f32 %v286, %v347
  %349 = vmatmul.bf16.gmra.mxu0 %v265
  %v350 = vpop.f32.mrf.mxu0
  %v351 = vadd.f32 %v286, %v350
  %v352 = vpop.f32.mrf.mxu0
  %v353 = vadd.f32 %v286, %v352
  %354 = vmatmul.bf16.gmra.mxu0 %v266
  %v355 = vpop.f32.mrf.mxu0
  %v356 = vadd.f32 %v286, %v355
  %v357 = vpop.f32.mrf.mxu0
  %v358 = vadd.f32 %v286, %v357
  %359 = vmatmul.bf16.gmra.mxu0 %v267
  %v360 = vpop.f32.mrf.mxu0
  %v361 = vadd.f32 %v286, %v360
  %v362 = vpop.f32.mrf.mxu0
  %v363 = vadd.f32 %v286, %v362
  %364 = vdwg.mxu0
  %v365 = vpack.c.bf16 %v346, %v346
  %v366 = vpack.c.bf16 %v348, %v348
  %v367 = vpack.c.bf16 %v351, %v351
  %v368 = vpack.c.bf16 %v353, %v353
  %v369 = vpack.c.bf16 %v356, %v356
  %v370 = vpack.c.bf16 %v358, %v358
  %v371 = vpack.c.bf16 %v361, %v361
  %v372 = vpack.c.bf16 %v363, %v363
  %vm373 = vcmask 396288
  %374 = vst.msk [vmem:[%s7] sm:$0xf] %vm373, %v365
  %375 = vst.msk [vmem:[%s7 + $0x4] sm:$0xf] %vm373, %v366
  %376 = vst.msk [vmem:[%s7 + $0x8] sm:$0xf] %vm373, %v367
  %377 = vst.msk [vmem:[%s7 + $0xc] sm:$0xf] %vm373, %v368
  %378 = vst.msk [vmem:[%s7 + $0x10] sm:$0xf] %vm373, %v369
  %379 = vst.msk [vmem:[%s7 + $0x14] sm:$0xf] %vm373, %v370
  %380 = vst.msk [vmem:[%s7 + $0x18] sm:$0xf] %vm373, %v371
  %381 = vst.msk [vmem:[%s7 + $0x1c] sm:$0xf] %vm373, %v372
  // Predicated region
  $region30: #{tpu_custom_call.1} parent=0 // pred_check
    _
  $region31: #{tpu_custom_call.1} parent=0 // pred_check_branch
    %383 = sbr.rel (0) target = $region33
  $region32: #{tpu_custom_call.1} parent=0 // pred_region
    _
  $region33: #{tpu_custom_call.1} parent=0 // pred_fallthru
    _
  // Predicated region
  $region34: #{tpu_custom_call.1} parent=0 // pred_check
    _
  $region35: #{tpu_custom_call.1} parent=0 // pred_check_branch
    %385 = sbr.rel (0) target = $region37
  $region36: #{tpu_custom_call.1} parent=0 // pred_region
    _
  $region37: #{tpu_custom_call.1} parent=0 // pred_fallthru
    _

</llo_original>
